<compile_context>
chip_gen: v6e
topology: v6e:2x2x1
jax: 0.10.0
libtpu: 0.0.40
codegen_flags: <defaults>
</compile_context>

<pallas_src>
import jax
import jax.numpy as jnp
from jax import lax
from jax.experimental import pallas as pl
from jax.experimental.pallas import tpu as pltpu

BN_EPS = 1e-5   # PyTorch BatchNorm2d default eps
N_IN = 16       # Linear in_features
N_OUT = 32      # Linear out_features
N_PAD = 128     # lane-dense padded output width


def _fused_bn_linear_tanh_kernel(x_ref, w_ref, wsum_ref, b_ref, o_ref):
    # x_ref:    (M, 16)    raw activations ((1,1,16,31) row-major reshaped to (31,16))
    # w_ref:    (128, 16)  Linear weight in native (out, in) layout, out-dim zero-padded
    # wsum_ref: (1, 128)   precomputed sum of W over the in-dim (per output column)
    # b_ref:    (1, 128)   Linear bias, zero-padded
    # o_ref:    (M, 128)   lane-dense output tile; columns >= 32 hold tanh(0) = 0
    x = x_ref[...]
    inv_n = 1.0 / (x.shape[0] * x.shape[1])   # N*H*W elements of the single BN channel

    # MXU: matmul on raw x, independent of the BN reductions below -> overlaps.
    xw = lax.dot_general(
        x, w_ref[...],
        dimension_numbers=(((1,), (1,)), ((), ())),   # contract the in-dim of both
        preferred_element_type=jnp.float32,
    )  # (M, 128)

    # Single-pass BN statistics: two independent reductions (co-issue on XLU/VPU).
    s1 = jnp.sum(x)
    s2 = jnp.sum(x * x)
    mean = s1 * inv_n
    var = s2 * inv_n - mean * mean            # biased variance (PyTorch normalization)
    inv_std = lax.rsqrt(var + BN_EPS)         # gamma=1, beta=0 (default BN affine init)

    # BN applied after the matmul as an affine correction:
    #   x_hat @ W^T = inv_std * (x @ W^T - mean * colsum_in(W))
    y = inv_std * (xw - mean * wsum_ref[...]) + b_ref[...]
    o_ref[...] = jnp.tanh(y)


def prepare_params(w, b):
    """One-time parameter prep (not per-call): keep native (out, in) layout,
    zero-pad the out-dim to 128 lanes, precompute colsum of W over the in-dim."""
    w = w.astype(jnp.float32)
    b = b.astype(jnp.float32)
    w_pad = jnp.zeros((N_PAD, N_IN), jnp.float32).at[:N_OUT, :].set(w)
    b_pad = jnp.zeros((1, N_PAD), jnp.float32).at[0, :N_OUT].set(b)
    wsum_pad = jnp.sum(w_pad, axis=1)[None, :]             # (1, 128)
    return w_pad, wsum_pad, b_pad


@jax.jit
def model_forward(x_nchw, w_pad, wsum_pad, b_pad):
    """x_nchw: (1, 1, 16, 31) f32; padded params from prepare_params."""
    # Row-major reshape == torch .view((-1, 16)); BN of the single channel is a
    # reduction over all elements, so reshaping first does not change semantics.
    x_flat = x_nchw.reshape(-1, N_IN).astype(jnp.float32)   # (31, 16)
    M = x_flat.shape[0]

    cost = pl.CostEstimate(
        flops=2 * M * N_IN * N_PAD + 6 * M * N_IN,
        transcendentals=M * N_PAD + 1,
        bytes_accessed=4 * (M * N_IN + N_PAD * N_IN + 2 * N_PAD + M * N_PAD),
    )

    out_pad = pl.pallas_call(
        _fused_bn_linear_tanh_kernel,
        out_shape=jax.ShapeDtypeStruct((M, N_PAD), jnp.float32),
        grid_spec=pltpu.PrefetchScalarGridSpec(
            num_scalar_prefetch=0,
            grid=(),                       # tiny latency-bound problem: single invocation
            in_specs=[
                pl.BlockSpec((M, N_IN), lambda: (0, 0)),
                pl.BlockSpec((N_PAD, N_IN), lambda: (0, 0)),
                pl.BlockSpec((1, N_PAD), lambda: (0, 0)),
                pl.BlockSpec((1, N_PAD), lambda: (0, 0)),
            ],
            out_specs=pl.BlockSpec((M, N_PAD), lambda: (0, 0)),
        ),
        cost_estimate=cost,
    )(x_flat, w_pad, wsum_pad, b_pad)

    return out_pad[:, :N_OUT]              # (31, 32) — matches the PyTorch module output


def _reference(x_nchw, w, b):
    # pure-JAX reference for sanity checking (two-pass statistics)
    x = x_nchw.astype(jnp.float32)
    mean = jnp.mean(x)
    var = jnp.mean((x - mean) ** 2)
    x_hat = (x - mean) / jnp.sqrt(var + BN_EPS)
    x_flat = x_hat.reshape(-1, N_IN)
    return jnp.tanh(x_flat @ w.T + b)


# TODO(synk): BatchNorm running_mean/running_var buffer updates (a training-mode
# side effect) are not materialized; they do not affect the forward output.

if __name__ == "__main__":
    key = jax.random.PRNGKey(0)
    k_x, k_w, k_b = jax.random.split(key, 3)

    # deterministic synthetic params (shapes per nn.Linear(16, 32)) and input
    x1 = jax.random.normal(k_x, (1, 1, 16, 31), dtype=jnp.float32)
    bound = 1.0 / jnp.sqrt(16.0)
    w = jax.random.uniform(k_w, (32, 16), minval=-bound, maxval=bound, dtype=jnp.float32)
    b = jax.random.uniform(k_b, (32,), minval=-bound, maxval=bound, dtype=jnp.float32)

    w_pad, wsum_pad, b_pad = prepare_params(w, b)

    out = model_forward(x1, w_pad, wsum_pad, b_pad)
    jax.block_until_ready(out)

    ref = _reference(x1, w, b)
    assert out.shape == (31, 32)
    assert jnp.allclose(out, ref, atol=1e-4, rtol=1e-4), float(jnp.max(jnp.abs(out - ref)))

    print("KERNEL_OK")
</pallas_src>

<mosaic_0001>
module attributes {stable_mosaic.version = 11 : i64} {
  func.func @_fused_bn_linear_tanh_kernel(%arg0: memref<31x16xf32, #tpu.memory_space<vmem>>, %arg1: memref<128x16xf32, #tpu.memory_space<vmem>>, %arg2: memref<1x128xf32, #tpu.memory_space<vmem>>, %arg3: memref<1x128xf32, #tpu.memory_space<vmem>>, %arg4: memref<31x128xf32, #tpu.memory_space<vmem>>) attributes {dimension_semantics = [], scalar_prefetch = 0 : i64, scratch_operands = 0 : i64, tpu.core_type = #tpu.core_type<tc>} {
    %c0 = arith.constant 0 : index
    %c0_0 = arith.constant 0 : index
    %0 = vector.load %arg0[%c0, %c0_0] : memref<31x16xf32, #tpu.memory_space<vmem>>, vector<31x16xf32>
    %c0_1 = arith.constant 0 : index
    %c0_2 = arith.constant 0 : index
    %1 = vector.load %arg1[%c0_1, %c0_2] : memref<128x16xf32, #tpu.memory_space<vmem>>, vector<128x16xf32>
    %cst = arith.constant dense<0.000000e+00> : vector<31x128xf32>
    %2 = tpu.matmul %0, %1, %cst {dimension_numbers = #tpu.dot_dimension_numbers<[1], [1], [0], [0], [0, 0, 1, 0], [], []>} : vector<31x16xf32>, vector<128x16xf32>, vector<31x128xf32> -> vector<31x128xf32>
    %3 = vector.shape_cast %0 : vector<31x16xf32> to vector<1x31x16xf32>
    %cst_3 = arith.constant dense<0.000000e+00> : vector<1xf32>
    %4 = vector.multi_reduction <add>, %3, %cst_3 [1, 2] : vector<1x31x16xf32> to vector<1xf32>
    %5 = vector.shape_cast %4 : vector<1xf32> to vector<1x1x1xf32>
    %6 = vector.extract %5[0, 0, 0] : f32 from vector<1x1x1xf32>
    %7 = arith.mulf %0, %0 : vector<31x16xf32>
    %8 = vector.shape_cast %7 : vector<31x16xf32> to vector<1x31x16xf32>
    %cst_4 = arith.constant dense<0.000000e+00> : vector<1xf32>
    %9 = vector.multi_reduction <add>, %8, %cst_4 [1, 2] : vector<1x31x16xf32> to vector<1xf32>
    %10 = vector.shape_cast %9 : vector<1xf32> to vector<1x1x1xf32>
    %11 = vector.extract %10[0, 0, 0] : f32 from vector<1x1x1xf32>
    %cst_5 = arith.constant 0.00201612897 : f32
    %12 = arith.mulf %6, %cst_5 : f32
    %cst_6 = arith.constant 0.00201612897 : f32
    %13 = arith.mulf %11, %cst_6 : f32
    %14 = arith.mulf %12, %12 : f32
    %15 = arith.subf %13, %14 : f32
    %cst_7 = arith.constant 9.99999974E-6 : f32
    %16 = arith.addf %15, %cst_7 : f32
    %17 = math.rsqrt %16 : f32
    %c0_8 = arith.constant 0 : index
    %c0_9 = arith.constant 0 : index
    %18 = vector.load %arg2[%c0_8, %c0_9] : memref<1x128xf32, #tpu.memory_space<vmem>>, vector<1x128xf32>
    %19 = vector.broadcast %12 : f32 to vector<1x128xf32>
    %20 = arith.mulf %19, %18 : vector<1x128xf32>
    %21 = vector.broadcast %20 : vector<1x128xf32> to vector<31x128xf32>
    %22 = arith.subf %2, %21 : vector<31x128xf32>
    %23 = vector.broadcast %17 : f32 to vector<31x128xf32>
    %24 = arith.mulf %23, %22 : vector<31x128xf32>
    %c0_10 = arith.constant 0 : index
    %c0_11 = arith.constant 0 : index
    %25 = vector.load %arg3[%c0_10, %c0_11] : memref<1x128xf32, #tpu.memory_space<vmem>>, vector<1x128xf32>
    %26 = vector.broadcast %25 : vector<1x128xf32> to vector<31x128xf32>
    %27 = arith.addf %24, %26 : vector<31x128xf32>
    %28 = math.tanh %27 : vector<31x128xf32>
    %c0_12 = arith.constant 0 : index
    %c0_13 = arith.constant 0 : index
    %29 = vector.load %arg4[%c0_12, %c0_13] : memref<31x128xf32, #tpu.memory_space<vmem>>, vector<31x128xf32>
    tpu.vector_store %arg4[%c0_12, %c0_13], %28 {strides = array<i32>} : memref<31x128xf32, #tpu.memory_space<vmem>>, vector<31x128xf32>,
    return
  }
}

</mosaic_0001>

<llo_original>
// kernel: model_forward.1
$region0: #{model_forward.1}
  #allocation0 [shape = 'u32[]', space=smem, size = 0x4, offset = 0x4, fixed_abs, tag = 'smem constant byte address 0x4 - core index']
  #allocation1 [shape = 'u32[144,128]{1,0:T(1,128)}', space=vmem, size = 0x12000, scoped, tag = 'internal scratch']
  %s0 = inlined_call_operand.vmem [shape: f32[31,16], index: 0, kind: input, shape index: {}]
  %s1 = inlined_call_operand.vmem [shape: f32[128,16], index: 1, kind: input, shape index: {}]
  %s2 = inlined_call_operand.vmem [shape: f32[1,128], index: 2, kind: input, shape index: {}]
  %s3 = inlined_call_operand.vmem [shape: f32[1,128], index: 3, kind: input, shape index: {}]
  %s4 = inlined_call_operand.hbm [shape: f32[31,128], index: 4, kind: output, shape index: {}]
  %s5 = sld [smem:[#allocation0]]
  $region26: #{model_forward.1} parent=0
    _
  %s7 = ssub.s32 1, %s5
  %s8 = scalar_select 0, %s7, %s5
  $region1: #{model_forward.1} parent=0
    #allocation2 [shape = 'u8[16384]{0}', space=vmem, size = 0x4000, scoped, tag = 'output window, operand 0, single buffered']
    #allocation3 [shape = 's32[1]{0}', space=sflag, size = 0x4, scoped, tag = 'scoped memory for model_forward.1']
    %9 = vsyncpa [#allocation3], 0
    // Predicated region
    $region2: #{model_forward.1} parent=1 // pred_check
      _
    $region3: #{model_forward.1} parent=1 // pred_check_branch
      %11 = sbr.rel (0) target = $region5
    $region4: #{model_forward.1} parent=1 // pred_region
      _
    $region5: #{model_forward.1} parent=1 // pred_fallthru
      _
    // Predicated region
    $region6: #{model_forward.1} parent=1 // pred_check
      _
    $region7: #{model_forward.1} parent=1 // pred_check_branch
      %13 = sbr.rel (0) target = $region9
    $region8: #{model_forward.1} parent=1 // pred_region
      _
    $region9: #{model_forward.1} parent=1 // pred_fallthru
      _
    // Predicated region
    $region10: #{model_forward.1} parent=1 // pred_check
      _
    $region11: #{model_forward.1} parent=1 // pred_check_branch
      %15 = sbr.rel (0) target = $region13
    $region12: #{model_forward.1} parent=1 // pred_region
      _
    $region13: #{model_forward.1} parent=1 // pred_fallthru
      _
    // Predicated region
    $region14: #{model_forward.1} parent=1 // pred_check
      _
    $region15: #{model_forward.1} parent=1 // pred_check_branch
      %17 = sbr.rel (0) target = $region17
    $region16: #{model_forward.1} parent=1 // pred_region
      _
    $region17: #{model_forward.1} parent=1 // pred_fallthru
      _
    %v18 = vld [vmem:[%s0] sm:$0xff]
    %v19 = vld [vmem:[%s0 + $0x8] sm:$0xff]
    %v20 = vld [vmem:[%s0 + $0x10] sm:$0xff]
    %v21 = vld [vmem:[%s0 + $0x18] sm:$0x7f]
    %v22 = vld [vmem:[%s1] sm:$0xff]
    %v23 = vld [vmem:[%s1 + $0x8] sm:$0xff]
    %v24 = vld [vmem:[%s1 + $0x10] sm:$0xff]
    %v25 = vld [vmem:[%s1 + $0x18] sm:$0xff]
    %v26 = vld [vmem:[%s1 + $0x20] sm:$0xff]
    %v27 = vld [vmem:[%s1 + $0x28] sm:$0xff]
    %v28 = vld [vmem:[%s1 + $0x30] sm:$0xff]
    %v29 = vld [vmem:[%s1 + $0x38] sm:$0xff]
    %v30 = vld [vmem:[%s1 + $0x40] sm:$0xff]
    %v31 = vld [vmem:[%s1 + $0x48] sm:$0xff]
    %v32 = vld [vmem:[%s1 + $0x50] sm:$0xff]
    %v33 = vld [vmem:[%s1 + $0x58] sm:$0xff]
    %v34 = vld [vmem:[%s1 + $0x60] sm:$0xff]
    %v35 = vld [vmem:[%s1 + $0x68] sm:$0xff]
    %v36 = vld [vmem:[%s1 + $0x70] sm:$0xff]
    %v37 = vld [vmem:[%s1 + $0x78] sm:$0xff]
    %vm38 = vcmask 130048
    %v40 = vsel %vm38, %v18, 0
    %v43 = vsel %vm38, %v19, 0
    %v46 = vsel %vm38, %v20, 0
    %v49 = vsel %vm38, %v21, 0
    %v52 = vsel %vm38, %v22, 0
    %v55 = vsel %vm38, %v23, 0
    %v58 = vsel %vm38, %v24, 0
    %v61 = vsel %vm38, %v25, 0
    %v64 = vsel %vm38, %v26, 0
    %v67 = vsel %vm38, %v27, 0
    %v70 = vsel %vm38, %v28, 0
    %v73 = vsel %vm38, %v29, 0
    %v76 = vsel %vm38, %v30, 0
    %v79 = vsel %vm38, %v31, 0
    %v82 = vsel %vm38, %v32, 0
    %v85 = vsel %vm38, %v33, 0
    %v88 = vsel %vm38, %v34, 0
    %v91 = vsel %vm38, %v35, 0
    %v94 = vsel %vm38, %v36, 0
    %v97 = vsel %vm38, %v37, 0
    %99 = vmatprep.subr.mxu0 0.0
    %100 = vmatpush1.xpose.msra.mxu0 %v97
    %101 = vmatprep.subr.mxu0 0.0
    %102 = vmatpush1.xpose.msra.mxu0 %v94
    %103 = vmatprep.subr.mxu0 0.0
    %104 = vmatpush1.xpose.msra.mxu0 %v91
    %105 = vmatprep.subr.mxu0 0.0
    %106 = vmatpush1.xpose.msra.mxu0 %v88
    %107 = vmatprep.subr.mxu0 0.0
    %108 = vmatpush1.xpose.msra.mxu0 %v85
    %109 = vmatprep.subr.mxu0 0.0
    %110 = vmatpush1.xpose.msra.mxu0 %v82
    %111 = vmatprep.subr.mxu0 0.0
    %112 = vmatpush1.xpose.msra.mxu0 %v79
    %113 = vmatprep.subr.mxu0 0.0
    %114 = vmatpush1.xpose.msra.mxu0 %v76
    %115 = vmatprep.subr.mxu0 0.0
    %116 = vmatpush1.xpose.msra.mxu0 %v73
    %117 = vmatprep.subr.mxu0 0.0
    %118 = vmatpush1.xpose.msra.mxu0 %v70
    %119 = vmatprep.subr.mxu0 0.0
    %120 = vmatpush1.xpose.msra.mxu0 %v67
    %121 = vmatprep.subr.mxu0 0.0
    %122 = vmatpush1.xpose.msra.mxu0 %v64
    %123 = vmatprep.subr.mxu0 0.0
    %124 = vmatpush1.xpose.msra.mxu0 %v61
    %125 = vmatprep.subr.mxu0 0.0
    %126 = vmatpush1.xpose.msra.mxu0 %v58
    %127 = vmatprep.subr.mxu0 0.0
    %128 = vmatpush1.xpose.msra.mxu0 %v55
    %129 = vmatprep.subr.mxu0 0.0
    %130 = vmatpush1.xpose.msra.mxu0 %v52
    %131 = vmatprep.subr.mxu0 0.0
    %132 = vmatpush2.xpose.msra.mxu0 0.0
    %133 = vmatprep.subr.mxu0 0.0
    %134 = vmatpush2.xpose.msra.mxu0 0.0
    %135 = vmatprep.subr.mxu0 0.0
    %136 = vmatpush2.xpose.msra.mxu0 0.0
    %137 = vmatprep.subr.mxu0 0.0
    %138 = vmatpush2.xpose.msra.mxu0 0.0
    %139 = vmatprep.subr.mxu0 0.0
    %140 = vmatpush2.xpose.msra.mxu0 0.0
    %141 = vmatprep.subr.mxu0 0.0
    %142 = vmatpush2.xpose.msra.mxu0 0.0
    %143 = vmatprep.subr.mxu0 0.0
    %144 = vmatpush2.xpose.msra.mxu0 0.0
    %145 = vmatprep.subr.mxu0 0.0
    %146 = vmatpush2.xpose.msra.mxu0 0.0
    %147 = vmatprep.subr.mxu0 0.0
    %148 = vmatpush2.xpose.msra.mxu0 0.0
    %149 = vmatprep.subr.mxu0 0.0
    %150 = vmatpush2.xpose.msra.mxu0 0.0
    %151 = vmatprep.subr.mxu0 0.0
    %152 = vmatpush2.xpose.msra.mxu0 0.0
    %153 = vmatprep.subr.mxu0 0.0
    %154 = vmatpush2.xpose.msra.mxu0 0.0
    %155 = vmatprep.subr.mxu0 0.0
    %156 = vmatpush2.xpose.msra.mxu0 0.0
    %157 = vmatprep.subr.mxu0 0.0
    %158 = vmatpush2.xpose.msra.mxu0 0.0
    %159 = vmatprep.subr.mxu0 0.0
    %160 = vmatpush2.xpose.msra.mxu0 0.0
    %161 = vmatprep.subr.mxu0 0.0
    %162 = vmatpush2.xpose.msra.mxu0 0.0
    %163 = vmatprep.mubr.f32.mxu0 0.0
    %164 = vmatmul.mubr.f32.gmra.mxu0 %v40
    %v165 = vpop.f32.mrf.mxu0
    %v166 = vadd.f32 0.0, %v165
    %v167 = vpop.f32.mrf.mxu0
    %168 = vmatprep.mubr.f32.mxu0 0.0
    %169 = vmatmul.mubr.f32.gmra.mxu0 %v43
    %v170 = vpop.f32.mrf.mxu0
    %v171 = vadd.f32 0.0, %v170
    %v172 = vpop.f32.mrf.mxu0
    %173 = vmatprep.mubr.f32.mxu0 0.0
    %174 = vmatmul.mubr.f32.gmra.mxu0 %v46
    %v175 = vpop.f32.mrf.mxu0
    %v176 = vadd.f32 0.0, %v175
    %v177 = vpop.f32.mrf.mxu0
    %178 = vmatprep.mubr.f32.mxu0 0.0
    %179 = vmatmul.mubr.f32.gmra.mxu0 %v49
    %v180 = vpop.f32.mrf.mxu0
    %v181 = vadd.f32 0.0, %v180
    %v182 = vpop.f32.mrf.mxu0
    %183 = vdwg.mxu0
    %v184 = vsel %vm38, %v18, 0.0
    %v185 = vsel %vm38, %v19, 0.0
    %v186 = vadd.f32 %v184, %v185
    %v187 = vsel %vm38, %v20, 0.0
    %v188 = vadd.f32 %v186, %v187
    %vm189 = vcmask 129024
    %v190 = vsel %vm189, %v21, 0.0
    %v191 = vadd.f32 %v188, %v190
    %192 = vadd.xlane.f32.xlu0 %v191
    %v193 = vpop.xlane.xlu0 %192
    %v194 = vrot.slane %v193, 4
    %v195 = vadd.f32 %v193, %v194
    %v196 = vrot.slane %v195, 2
    %v197 = vadd.f32 %v195, %v196
    %v198 = vrot.slane %v197, 1
    %v199 = vadd.f32 %v197, %v198
    %s200 = vtos %v199
    %v201 = vmul.f32 %v18, %v18
    %v202 = vmul.f32 %v19, %v19
    %v203 = vmul.f32 %v20, %v20
    %v204 = vmul.f32 %v21, %v21
    %v205 = vsel %vm38, %v201, 0.0
    %v206 = vsel %vm38, %v202, 0.0
    %v207 = vadd.f32 %v205, %v206
    %v208 = vsel %vm38, %v203, 0.0
    %v209 = vadd.f32 %v207, %v208
    %v210 = vsel %vm189, %v204, 0.0
    %v211 = vadd.f32 %v209, %v210
    %212 = vadd.xlane.f32.xlu0 %v211
    %v213 = vpop.xlane.xlu0 %212
    %v214 = vrot.slane %v213, 4
    %v215 = vadd.f32 %v213, %v214
    %v216 = vrot.slane %v215, 2
    %v217 = vadd.f32 %v215, %v216
    %v218 = vrot.slane %v217, 1
    %v219 = vadd.f32 %v217, %v218
    %s220 = vtos %v219
    %s221 = smul.f32 %s200, 0.002016129
    %s222 = smul.f32 %s220, 0.002016129
    %s223 = smul.f32 %s221, %s221
    %s224 = ssub.f32 %s222, %s223
    %s225 = sadd.f32 %s224, 1e-05
    %v226 = vstv %s225
    %v227 = vrsqrt.pop %v226
    %s228 = vtos %v227
    %v229 = vld [vmem:[%s2] sm:$0x1]
    %v230 = vstv %s221
    %v231 = vmul.f32 %v230, %v229
    %v233 = vlaneseq
    %v234 = vshrl.u32 %v233, 7
    %v235 = vsub.s32 0, %v234
    %v236 = vrot.slane %v231, %v235
    %v238 = vsub.f32 %v166, %v236
    %v239 = vsub.f32 %v171, %v236
    %v240 = vsub.f32 %v176, %v236
    %v241 = vsub.f32 %v181, %v236
    %v242 = vstv %s228
    %v243 = vmul.f32 %v242, %v238
    %v244 = vmul.f32 %v242, %v239
    %v245 = vmul.f32 %v242, %v240
    %v246 = vmul.f32 %v242, %v241
    %v247 = vld [vmem:[%s3] sm:$0x1]
    %v249 = vlaneseq
    %v250 = vshrl.u32 %v249, 7
    %v251 = vsub.s32 0, %v250
    %v252 = vrot.slane %v247, %v251
    %v254 = vadd.f32 %v243, %v252
    %v255 = vadd.f32 %v244, %v252
    %v256 = vadd.f32 %v245, %v252
    %v257 = vadd.f32 %v246, %v252
    %v258 = vtanh.pop %v254
    %v259 = vtanh.pop %v255
    %v260 = vtanh.pop %v256
    %v261 = vtanh.pop %v257
    %262 = vst [vmem:[#allocation2] sm:$0xff] %v258
    %263 = vst [vmem:[#allocation2 + $0x8] sm:$0xff] %v259
    %264 = vst [vmem:[#allocation2 + $0x10] sm:$0xff] %v260
    %265 = vst [vmem:[#allocation2 + $0x18] sm:$0x7f] %v261
    // Predicated region
    $region18: #{model_forward.1} parent=1 // pred_check
      _
    $region19: #{model_forward.1} parent=1 // pred_check_branch
      %267 = sbr.rel (0) target = $region21
    $region20: #{model_forward.1} parent=1 // pred_region
      %s269 = ssub.s32 512, 512
      %270 = vsyncadd [#allocation3], %s269
      %s271 = sshll.u32 [#allocation2], 4
      %s272 = int_to_ptr.vmem [resolvable:$true] %s271
      %277 = dma.vmem_to_hbm [thread:$0]  %s272, 512, %s4, [#allocation3], 128, 128, 8
    $region21: #{model_forward.1} parent=1 // pred_fallthru
      _
    // Predicated region
    $region22: #{model_forward.1} parent=1 // pred_check
      _
    $region23: #{model_forward.1} parent=1 // pred_check_branch
      %279 = sbr.rel (0) target = $region25
    $region24: #{model_forward.1} parent=1 // pred_region
      %280 = dma.done [#allocation3], 512
    $region25: #{model_forward.1} parent=1 // pred_fallthru
      _
    %281 = vsyncpa [#allocation3], 1

</llo_original>
